<compile_context>
chip_gen: v7x
topology: tpu7x:2x2x1
jax: 0.10.0
libtpu: 0.0.40
codegen_flags: <defaults>
</compile_context>

<pallas_src>
import functools

import jax
import jax.numpy as jnp
from jax import lax
from jax.experimental import pallas as pl
from jax.experimental.pallas import tpu as pltpu


_LANE = 128              # last block dim multiple (lane width)
_SUBLANE = 8             # second-to-last block dim multiple
_MAX_STATIC_UNROLL = 8   # fully unroll the layer chain up to this many body layers
_FORI_UNROLL = 4         # partial unroll inside lax.fori_loop for deeper stacks


def _round_up(x: int, m: int) -> int:
    return (x + m - 1) // m * m


def _separator_kernel(x_ref, w_ref, b_ref, o_ref, *, n_layers: int, mxu_dtype):
    """h <- relu(h @ W^T + b), n_layers times with identical W, b.

    x_ref: (TILE_M, Dp) f32 activations   w_ref: (Dp, Dp) mxu_dtype, ALREADY W^T (in, out)
    b_ref: (1, Dp) f32 bias               o_ref: (TILE_M, Dp) f32 output
    """
    if n_layers == 0:
        o_ref[...] = x_ref[...]
        return

    w = w_ref[...]                            # bf16; cast + transpose already done in wrapper
    bias = b_ref[...]                         # (1, Dp) f32; broadcasts along sublanes in vadd
    dims = (((1,), (0,)), ((), ()))           # (M,K) @ (K,N): MXU-native feed, no XLU transpose

    def layer(h_mxu):
        z = lax.dot_general(h_mxu, w, dims, preferred_element_type=jnp.float32)
        return jnp.maximum(z + bias, 0.0)     # f32 bias-add + ReLU (v5e has no bf16 VPU path)

    h = x_ref[...].astype(mxu_dtype)
    n_body = n_layers - 1                     # last layer peeled -> store straight from f32
    if n_body > 0:
        if n_body <= _MAX_STATIC_UNROLL:
            for _ in range(n_body):           # static: whole chain visible to LLO scheduler
                h = layer(h).astype(mxu_dtype)   # single carried (TILE_M, Dp) array per layer
        else:
            h = lax.fori_loop(0, n_body,
                              lambda _, hh: layer(hh).astype(mxu_dtype),
                              h, unroll=min(_FORI_UNROLL, n_body))
    o_ref[...] = layer(h).astype(o_ref.dtype)


def _vmem_capacity_bytes() -> int:
    try:
        return int(pltpu.get_tpu_info().vmem_capacity_bytes)
    except Exception:
        return 64 << 20   # v7x per-TC physical size: safe lower bound


def _vmem_need_bytes(tile_m: int, dp: int, n_layers: int, w_itemsize: int) -> int:
    act_f32 = tile_m * dp * 4
    act_mxu = tile_m * dp * w_itemsize
    w_bytes = dp * dp * w_itemsize
    # Live temporaries scale with the visible (unrolled) chain depth, not total n_layers.
    visible = n_layers if (n_layers - 1) <= _MAX_STATIC_UNROLL else (_FORI_UNROLL + 1)
    tmp = (visible + 1) * act_mxu + 3 * act_f32
    # in + out activation double buffers, weight (x2 headroom in case of double buffering),
    # visible temporaries, 1 MiB slack.
    return 2 * 2 * act_f32 + 2 * w_bytes + tmp + (1 << 20)


def separator_forward(x, w, b, n_layers: int, *, tile_m=None, mxu_dtype=jnp.bfloat16):
    """x: (rows, D) f32; w: (D, D) nn.Linear weight (out, in); b: (D,). Returns (rows, D)."""
    rows, d = x.shape
    dp = _round_up(d, _LANE)
    w_itemsize = jnp.dtype(mxu_dtype).itemsize

    vmem_cap = _vmem_capacity_bytes()
    vmem_budget = int(0.85 * vmem_cap)

    if tile_m is None:
        # Larger tiles only on big-VMEM parts (v5e/v6e, 128 MiB) with enough rows; on v7x
        # (64 MiB / TC) stay at 256 so the row axis keeps >=2 grid steps for both TCs.
        tile_m = 512 if (vmem_cap >= (96 << 20) and rows >= 2 * 512) else 256
    tile_m = max(_SUBLANE, min(tile_m, _round_up(rows, _SUBLANE)))
    tile_m = _round_up(tile_m, _SUBLANE)
    while tile_m > _SUBLANE and _vmem_need_bytes(tile_m, dp, n_layers, w_itemsize) > vmem_budget:
        tile_m = max(_SUBLANE, _round_up(tile_m // 2, _SUBLANE))

    rows_p = _round_up(rows, tile_m)

    # Zero-pad to lane/MXU-friendly shapes. Zero-padded W columns/rows and zero bias keep
    # padded features exactly 0 through every ReLU layer, so the final slice is exact.
    x_p = jnp.pad(x, ((0, rows_p - rows), (0, dp - d)))
    w_p = jnp.pad(w, ((0, dp - d), (0, dp - d))).T.astype(mxu_dtype)   # (Dp_in, Dp_out) bf16
    b_p = jnp.pad(b, (0, dp - d)).reshape(1, dp).astype(jnp.float32)

    grid = (rows_p // tile_m,)
    vmem_limit = int(min(max(_vmem_need_bytes(tile_m, dp, n_layers, w_itemsize), 4 << 20),
                         vmem_budget))

    cost = pl.CostEstimate(
        flops=2 * rows_p * dp * dp * max(n_layers, 1),
        transcendentals=0,
        bytes_accessed=2 * rows_p * dp * 4 + dp * dp * w_itemsize + dp * 4,
    )

    kernel = functools.partial(_separator_kernel, n_layers=n_layers, mxu_dtype=mxu_dtype)

    def build(single_buffer_consts: bool):
        const_kw = {"pipeline_mode": pl.Buffered(1)} if single_buffer_consts else {}
        return pl.pallas_call(
            kernel,
            out_shape=jax.ShapeDtypeStruct((rows_p, dp), x.dtype),
            grid=grid,
            in_specs=[
                pl.BlockSpec((tile_m, dp), lambda i: (i, 0)),            # activations: row-tiled
                pl.BlockSpec((dp, dp), lambda i: (0, 0), **const_kw),    # W^T: fetched once
                pl.BlockSpec((1, dp), lambda i: (0, 0), **const_kw),     # bias: fetched once
            ],
            out_specs=pl.BlockSpec((tile_m, dp), lambda i: (i, 0)),
            compiler_params=pltpu.CompilerParams(
                dimension_semantics=("parallel",),   # v7x: shard row tiles across the 2 TCs
                vmem_limit_bytes=vmem_limit,
            ),
            cost_estimate=cost,
        )

    try:
        out_p = jax.block_until_ready(build(True)(x_p, w_p, b_p))
    except Exception:
        # Fallback if this JAX build rejects Buffered(1) on a top-level BlockSpec.
        out_p = build(False)(x_p, w_p, b_p)

    return out_p[:rows, :d]


def separator_reference(x, w, b, n_layers: int):
    """Pure-JAX f32 reference mirroring the PyTorch semantics (N identical Linear+ReLU)."""
    h = x
    for _ in range(n_layers):
        h = jnp.maximum(h @ w.T + b, 0.0)
    return h


if __name__ == "__main__":
    # Small shapes: batch=2, seq=8, hidden=32, N=6 layers.
    B, T, D, N = 2, 8, 32, 6

    key = jax.random.PRNGKey(0)
    kx, kw, kb = jax.random.split(key, 3)

    x = jax.random.normal(kx, (B, T, D), dtype=jnp.float32)
    # Deterministic nn.Linear-like init (uniform in +-1/sqrt(D)); all N clones share it.
    bound = 1.0 / (D ** 0.5)
    w = jax.random.uniform(kw, (D, D), minval=-bound, maxval=bound, dtype=jnp.float32)
    b = jax.random.uniform(kb, (D,), minval=-bound, maxval=bound, dtype=jnp.float32)

    x2d = x.reshape(B * T, D)               # layout: (B*T, D), feature-last

    out = separator_forward(x2d, w, b, N)
    out = jax.block_until_ready(out)

    ref = separator_reference(x2d, w, b, N)
    assert out.shape == (B * T, D)
    # bf16 matmul inputs (f32 accumulate) over 6 layers -> loose-ish tolerance vs f32 ref.
    assert jnp.allclose(out, ref, atol=2e-2, rtol=2e-2), "mismatch vs reference"

    print("KERNEL_OK")
</pallas_src>

<mosaic_0001>
module attributes {stable_mosaic.version = 11 : i64} {
  func.func @_separator_kernel(%arg0: i32, %arg1: memref<16x128xf32, #tpu.memory_space<vmem>>, %arg2: memref<128x128xbf16, #tpu.memory_space<vmem>>, %arg3: memref<1x128xf32, #tpu.memory_space<vmem>>, %arg4: memref<16x128xf32, #tpu.memory_space<vmem>>) attributes {dimension_semantics = [#tpu.dimension_semantics<parallel>], iteration_bounds = array<i64: 1>, scalar_prefetch = 0 : i64, scratch_operands = 0 : i64, tpu.core_type = #tpu.core_type<tc>, window_params = [{transform_indices = @transform_0, window_bounds = array<i64: 16, 128>}, {pipeline_mode = #tpu.pipeline_mode<synchronous>, transform_indices = @transform_1, window_bounds = array<i64: 128, 128>}, {pipeline_mode = #tpu.pipeline_mode<synchronous>, transform_indices = @transform_2, window_bounds = array<i64: 1, 128>}, {transform_indices = @transform_3, window_bounds = array<i64: 16, 128>}]} {
    %c0 = arith.constant 0 : index
    %c0_0 = arith.constant 0 : index
    %0 = vector.load %arg2[%c0, %c0_0] : memref<128x128xbf16, #tpu.memory_space<vmem>>, vector<128x128xbf16>
    %c0_1 = arith.constant 0 : index
    %c0_2 = arith.constant 0 : index
    %1 = vector.load %arg3[%c0_1, %c0_2] : memref<1x128xf32, #tpu.memory_space<vmem>>, vector<1x128xf32>
    %c0_3 = arith.constant 0 : index
    %c0_4 = arith.constant 0 : index
    %2 = vector.load %arg1[%c0_3, %c0_4] : memref<16x128xf32, #tpu.memory_space<vmem>>, vector<16x128xf32>
    %3 = arith.truncf %2 : vector<16x128xf32> to vector<16x128xbf16>
    %cst = arith.constant dense<0.000000e+00> : vector<16x128xf32>
    %4 = tpu.matmul %3, %0, %cst {dimension_numbers = #tpu.dot_dimension_numbers<[1], [0], [0], [1], [0, 0, 1, 1], [], []>} : vector<16x128xbf16>, vector<128x128xbf16>, vector<16x128xf32> -> vector<16x128xf32>
    %5 = vector.broadcast %1 : vector<1x128xf32> to vector<16x128xf32>
    %6 = arith.addf %4, %5 : vector<16x128xf32>
    %cst_5 = arith.constant 0.000000e+00 : f32
    %7 = vector.broadcast %cst_5 : f32 to vector<16x128xf32>
    %8 = arith.maximumf %6, %7 : vector<16x128xf32>
    %9 = arith.truncf %8 : vector<16x128xf32> to vector<16x128xbf16>
    %cst_6 = arith.constant dense<0.000000e+00> : vector<16x128xf32>
    %10 = tpu.matmul %9, %0, %cst_6 {dimension_numbers = #tpu.dot_dimension_numbers<[1], [0], [0], [1], [0, 0, 1, 1], [], []>} : vector<16x128xbf16>, vector<128x128xbf16>, vector<16x128xf32> -> vector<16x128xf32>
    %11 = vector.broadcast %1 : vector<1x128xf32> to vector<16x128xf32>
    %12 = arith.addf %10, %11 : vector<16x128xf32>
    %cst_7 = arith.constant 0.000000e+00 : f32
    %13 = vector.broadcast %cst_7 : f32 to vector<16x128xf32>
    %14 = arith.maximumf %12, %13 : vector<16x128xf32>
    %15 = arith.truncf %14 : vector<16x128xf32> to vector<16x128xbf16>
    %cst_8 = arith.constant dense<0.000000e+00> : vector<16x128xf32>
    %16 = tpu.matmul %15, %0, %cst_8 {dimension_numbers = #tpu.dot_dimension_numbers<[1], [0], [0], [1], [0, 0, 1, 1], [], []>} : vector<16x128xbf16>, vector<128x128xbf16>, vector<16x128xf32> -> vector<16x128xf32>
    %17 = vector.broadcast %1 : vector<1x128xf32> to vector<16x128xf32>
    %18 = arith.addf %16, %17 : vector<16x128xf32>
    %cst_9 = arith.constant 0.000000e+00 : f32
    %19 = vector.broadcast %cst_9 : f32 to vector<16x128xf32>
    %20 = arith.maximumf %18, %19 : vector<16x128xf32>
    %21 = arith.truncf %20 : vector<16x128xf32> to vector<16x128xbf16>
    %cst_10 = arith.constant dense<0.000000e+00> : vector<16x128xf32>
    %22 = tpu.matmul %21, %0, %cst_10 {dimension_numbers = #tpu.dot_dimension_numbers<[1], [0], [0], [1], [0, 0, 1, 1], [], []>} : vector<16x128xbf16>, vector<128x128xbf16>, vector<16x128xf32> -> vector<16x128xf32>
    %23 = vector.broadcast %1 : vector<1x128xf32> to vector<16x128xf32>
    %24 = arith.addf %22, %23 : vector<16x128xf32>
    %cst_11 = arith.constant 0.000000e+00 : f32
    %25 = vector.broadcast %cst_11 : f32 to vector<16x128xf32>
    %26 = arith.maximumf %24, %25 : vector<16x128xf32>
    %27 = arith.truncf %26 : vector<16x128xf32> to vector<16x128xbf16>
    %cst_12 = arith.constant dense<0.000000e+00> : vector<16x128xf32>
    %28 = tpu.matmul %27, %0, %cst_12 {dimension_numbers = #tpu.dot_dimension_numbers<[1], [0], [0], [1], [0, 0, 1, 1], [], []>} : vector<16x128xbf16>, vector<128x128xbf16>, vector<16x128xf32> -> vector<16x128xf32>
    %29 = vector.broadcast %1 : vector<1x128xf32> to vector<16x128xf32>
    %30 = arith.addf %28, %29 : vector<16x128xf32>
    %cst_13 = arith.constant 0.000000e+00 : f32
    %31 = vector.broadcast %cst_13 : f32 to vector<16x128xf32>
    %32 = arith.maximumf %30, %31 : vector<16x128xf32>
    %33 = arith.truncf %32 : vector<16x128xf32> to vector<16x128xbf16>
    %cst_14 = arith.constant dense<0.000000e+00> : vector<16x128xf32>
    %34 = tpu.matmul %33, %0, %cst_14 {dimension_numbers = #tpu.dot_dimension_numbers<[1], [0], [0], [1], [0, 0, 1, 1], [], []>} : vector<16x128xbf16>, vector<128x128xbf16>, vector<16x128xf32> -> vector<16x128xf32>
    %35 = vector.broadcast %1 : vector<1x128xf32> to vector<16x128xf32>
    %36 = arith.addf %34, %35 : vector<16x128xf32>
    %cst_15 = arith.constant 0.000000e+00 : f32
    %37 = vector.broadcast %cst_15 : f32 to vector<16x128xf32>
    %38 = arith.maximumf %36, %37 : vector<16x128xf32>
    %c0_16 = arith.constant 0 : index
    %c0_17 = arith.constant 0 : index
    %39 = vector.load %arg4[%c0_16, %c0_17] : memref<16x128xf32, #tpu.memory_space<vmem>>, vector<16x128xf32>
    tpu.vector_store %arg4[%c0_16, %c0_17], %38 {strides = array<i32>} : memref<16x128xf32, #tpu.memory_space<vmem>>, vector<16x128xf32>,
    return
  }
  func.func @transform_0(%arg0: i32) -> (i32, i32) {
    %c0_i32 = arith.constant 0 : i32
    %c0_i32_0 = arith.constant 0 : i32
    return %arg0, %c0_i32 : i32, i32
  }
  func.func @transform_1(%arg0: i32) -> (i32, i32) {
    %c0_i32 = arith.constant 0 : i32
    %c0_i32_0 = arith.constant 0 : i32
    %c0_i32_1 = arith.constant 0 : i32
    return %c0_i32, %c0_i32_0 : i32, i32
  }
  func.func @transform_2(%arg0: i32) -> (i32, i32) {
    %c0_i32 = arith.constant 0 : i32
    %c0_i32_0 = arith.constant 0 : i32
    %c0_i32_1 = arith.constant 0 : i32
    return %c0_i32, %c0_i32_0 : i32, i32
  }
  func.func @transform_3(%arg0: i32) -> (i32, i32) {
    %c0_i32 = arith.constant 0 : i32
    %c0_i32_0 = arith.constant 0 : i32
    return %arg0, %c0_i32 : i32, i32
  }
}

module attributes {stable_mosaic.version = 11 : i64} {
  func.func @_separator_kernel(%arg0: i32, %arg1: memref<16x128xf32, #tpu.memory_space<vmem>>, %arg2: memref<128x128xbf16, #tpu.memory_space<vmem>>, %arg3: memref<1x128xf32, #tpu.memory_space<vmem>>, %arg4: memref<16x128xf32, #tpu.memory_space<vmem>>) attributes {dimension_semantics = [#tpu.dimension_semantics<parallel>], iteration_bounds = array<i64: 1>, scalar_prefetch = 0 : i64, scratch_operands = 0 : i64, tpu.core_type = #tpu.core_type<tc>, window_params = [{transform_indices = @transform_0, window_bounds = array<i64: 16, 128>}, {pipeline_mode = #tpu.pipeline_mode<synchronous>, transform_indices = @transform_1, window_bounds = array<i64: 128, 128>}, {pipeline_mode = #tpu.pipeline_mode<synchronous>, transform_indices = @transform_2, window_bounds = array<i64: 1, 128>}, {transform_indices = @transform_3, window_bounds = array<i64: 16, 128>}]} {
    %c0 = arith.constant 0 : index
    %c0_0 = arith.constant 0 : index
    %0 = vector.load %arg2[%c0, %c0_0] : memref<128x128xbf16, #tpu.memory_space<vmem>>, vector<128x128xbf16>
    %c0_1 = arith.constant 0 : index
    %c0_2 = arith.constant 0 : index
    %1 = vector.load %arg3[%c0_1, %c0_2] : memref<1x128xf32, #tpu.memory_space<vmem>>, vector<1x128xf32>
    %c0_3 = arith.constant 0 : index
    %c0_4 = arith.constant 0 : index
    %2 = vector.load %arg1[%c0_3, %c0_4] : memref<16x128xf32, #tpu.memory_space<vmem>>, vector<16x128xf32>
    %3 = arith.truncf %2 : vector<16x128xf32> to vector<16x128xbf16>
    %cst = arith.constant dense<0.000000e+00> : vector<16x128xf32>
    %4 = tpu.matmul %3, %0, %cst {dimension_numbers = #tpu.dot_dimension_numbers<[1], [0], [0], [1], [0, 0, 1, 1], [], []>} : vector<16x128xbf16>, vector<128x128xbf16>, vector<16x128xf32> -> vector<16x128xf32>
    %5 = vector.broadcast %1 : vector<1x128xf32> to vector<16x128xf32>
    %6 = arith.addf %4, %5 : vector<16x128xf32>
    %cst_5 = arith.constant 0.000000e+00 : f32
    %7 = vector.broadcast %cst_5 : f32 to vector<16x128xf32>
    %8 = arith.maximumf %6, %7 : vector<16x128xf32>
    %9 = arith.truncf %8 : vector<16x128xf32> to vector<16x128xbf16>
    %cst_6 = arith.constant dense<0.000000e+00> : vector<16x128xf32>
    %10 = tpu.matmul %9, %0, %cst_6 {dimension_numbers = #tpu.dot_dimension_numbers<[1], [0], [0], [1], [0, 0, 1, 1], [], []>} : vector<16x128xbf16>, vector<128x128xbf16>, vector<16x128xf32> -> vector<16x128xf32>
    %11 = vector.broadcast %1 : vector<1x128xf32> to vector<16x128xf32>
    %12 = arith.addf %10, %11 : vector<16x128xf32>
    %cst_7 = arith.constant 0.000000e+00 : f32
    %13 = vector.broadcast %cst_7 : f32 to vector<16x128xf32>
    %14 = arith.maximumf %12, %13 : vector<16x128xf32>
    %15 = arith.truncf %14 : vector<16x128xf32> to vector<16x128xbf16>
    %cst_8 = arith.constant dense<0.000000e+00> : vector<16x128xf32>
    %16 = tpu.matmul %15, %0, %cst_8 {dimension_numbers = #tpu.dot_dimension_numbers<[1], [0], [0], [1], [0, 0, 1, 1], [], []>} : vector<16x128xbf16>, vector<128x128xbf16>, vector<16x128xf32> -> vector<16x128xf32>
    %17 = vector.broadcast %1 : vector<1x128xf32> to vector<16x128xf32>
    %18 = arith.addf %16, %17 : vector<16x128xf32>
    %cst_9 = arith.constant 0.000000e+00 : f32
    %19 = vector.broadcast %cst_9 : f32 to vector<16x128xf32>
    %20 = arith.maximumf %18, %19 : vector<16x128xf32>
    %21 = arith.truncf %20 : vector<16x128xf32> to vector<16x128xbf16>
    %cst_10 = arith.constant dense<0.000000e+00> : vector<16x128xf32>
    %22 = tpu.matmul %21, %0, %cst_10 {dimension_numbers = #tpu.dot_dimension_numbers<[1], [0], [0], [1], [0, 0, 1, 1], [], []>} : vector<16x128xbf16>, vector<128x128xbf16>, vector<16x128xf32> -> vector<16x128xf32>
    %23 = vector.broadcast %1 : vector<1x128xf32> to vector<16x128xf32>
    %24 = arith.addf %22, %23 : vector<16x128xf32>
    %cst_11 = arith.constant 0.000000e+00 : f32
    %25 = vector.broadcast %cst_11 : f32 to vector<16x128xf32>
    %26 = arith.maximumf %24, %25 : vector<16x128xf32>
    %27 = arith.truncf %26 : vector<16x128xf32> to vector<16x128xbf16>
    %cst_12 = arith.constant dense<0.000000e+00> : vector<16x128xf32>
    %28 = tpu.matmul %27, %0, %cst_12 {dimension_numbers = #tpu.dot_dimension_numbers<[1], [0], [0], [1], [0, 0, 1, 1], [], []>} : vector<16x128xbf16>, vector<128x128xbf16>, vector<16x128xf32> -> vector<16x128xf32>
    %29 = vector.broadcast %1 : vector<1x128xf32> to vector<16x128xf32>
    %30 = arith.addf %28, %29 : vector<16x128xf32>
    %cst_13 = arith.constant 0.000000e+00 : f32
    %31 = vector.broadcast %cst_13 : f32 to vector<16x128xf32>
    %32 = arith.maximumf %30, %31 : vector<16x128xf32>
    %33 = arith.truncf %32 : vector<16x128xf32> to vector<16x128xbf16>
    %cst_14 = arith.constant dense<0.000000e+00> : vector<16x128xf32>
    %34 = tpu.matmul %33, %0, %cst_14 {dimension_numbers = #tpu.dot_dimension_numbers<[1], [0], [0], [1], [0, 0, 1, 1], [], []>} : vector<16x128xbf16>, vector<128x128xbf16>, vector<16x128xf32> -> vector<16x128xf32>
    %35 = vector.broadcast %1 : vector<1x128xf32> to vector<16x128xf32>
    %36 = arith.addf %34, %35 : vector<16x128xf32>
    %cst_15 = arith.constant 0.000000e+00 : f32
    %37 = vector.broadcast %cst_15 : f32 to vector<16x128xf32>
    %38 = arith.maximumf %36, %37 : vector<16x128xf32>
    %c0_16 = arith.constant 0 : index
    %c0_17 = arith.constant 0 : index
    %39 = vector.load %arg4[%c0_16, %c0_17] : memref<16x128xf32, #tpu.memory_space<vmem>>, vector<16x128xf32>
    tpu.vector_store %arg4[%c0_16, %c0_17], %38 {strides = array<i32>} : memref<16x128xf32, #tpu.memory_space<vmem>>, vector<16x128xf32>,
    return
  }
  func.func @transform_0(%arg0: i32) -> (i32, i32) {
    %c0_i32 = arith.constant 0 : i32
    %c0_i32_0 = arith.constant 0 : i32
    return %arg0, %c0_i32 : i32, i32
  }
  func.func @transform_1(%arg0: i32) -> (i32, i32) {
    %c0_i32 = arith.constant 0 : i32
    %c0_i32_0 = arith.constant 0 : i32
    %c0_i32_1 = arith.constant 0 : i32
    return %c0_i32, %c0_i32_0 : i32, i32
  }
  func.func @transform_2(%arg0: i32) -> (i32, i32) {
    %c0_i32 = arith.constant 0 : i32
    %c0_i32_0 = arith.constant 0 : i32
    %c0_i32_1 = arith.constant 0 : i32
    return %c0_i32, %c0_i32_0 : i32, i32
  }
  func.func @transform_3(%arg0: i32) -> (i32, i32) {
    %c0_i32 = arith.constant 0 : i32
    %c0_i32_0 = arith.constant 0 : i32
    return %arg0, %c0_i32 : i32, i32
  }
}

</mosaic_0001>

<llo_original>
// kernel: tpu_custom_call.1
$region0: #{tpu_custom_call.1}
  #allocation0 [shape = 'u32[]', space=smem, size = 0x4, offset = 0x4, fixed_abs, tag = 'smem constant byte address 0x4 - core index']
  #allocation1 [shape = 'u32[144,128]{1,0:T(1,128)}', space=vmem, size = 0x12000, scoped, tag = 'internal scratch']
  %s0 = inlined_call_operand.hbm [shape: f32[16,128], index: 0, kind: input, shape index: {}]
  %s1 = inlined_call_operand.hbm [shape: bf16[128,128], index: 1, kind: input, shape index: {}]
  %s2 = inlined_call_operand.vmem [shape: f32[1,128], index: 2, kind: input, shape index: {}]
  %s3 = inlined_call_operand.hbm [shape: f32[16,128], index: 3, kind: output, shape index: {}]
  %s4 = sld [smem:[#allocation0]]
  $region30: #{tpu_custom_call.1} parent=0
    _
  %s6 = ssub.s32 1, %s4
  %s7 = scalar_select 0, %s6, %s4
  $region1: #{tpu_custom_call.1} parent=0
    #allocation2 [shape = 'u8[8192]{0}', space=vmem, size = 0x2000, scoped, tag = 'input window, operand 0, single buffered']
    #allocation3 [shape = 's32[1]{0}', space=sflag, size = 0x4, scoped, tag = 'scoped memory for tpu_custom_call.1']
    #allocation4 [shape = 's32[1]{0}', space=sflag, size = 0x4, scoped, tag = 'scoped memory for tpu_custom_call.1']
    #allocation5 [shape = 'u8[32768]{0}', space=vmem, size = 0x8000, scoped, tag = 'input window, operand 1, single buffered']
    #allocation6 [shape = 's32[1]{0}', space=sflag, size = 0x4, scoped, tag = 'scoped memory for tpu_custom_call.1']
    #allocation7 [shape = 'u8[8192]{0}', space=vmem, size = 0x2000, scoped, tag = 'output window, operand 0, single buffered']
    %8 = vsyncpa [#allocation3], 0
    %9 = vsyncpa [#allocation6], 0
    %10 = vsyncpa [#allocation4], 0
    // Predicated region
    $region2: #{tpu_custom_call.1} parent=1 // pred_check
      _
    $region3: #{tpu_custom_call.1} parent=1 // pred_check_branch
      %12 = sbr.rel (0) target = $region5
    $region4: #{tpu_custom_call.1} parent=1 // pred_region
      %s14 = ssub.s32 256, 256
      %15 = vsyncadd [#allocation3], %s14
      %s16 = sshll.u32 [#allocation2], 4
      %s17 = int_to_ptr.vmem [resolvable:$true] %s16
      %22 = dma.hbm_to_vmem [thread:$0]  %s0, 256, %s17, [#allocation3], 128, 128, 8
    $region5: #{tpu_custom_call.1} parent=1 // pred_fallthru
      _
    // Predicated region
    $region6: #{tpu_custom_call.1} parent=1 // pred_check
      _
    $region7: #{tpu_custom_call.1} parent=1 // pred_check_branch
      %24 = sbr.rel (0) target = $region9
    $region8: #{tpu_custom_call.1} parent=1 // pred_region
      %s26 = ssub.s32 1024, 1024
      %27 = vsyncadd [#allocation6], %s26
      %s28 = sshll.u32 [#allocation5], 4
      %s29 = int_to_ptr.vmem [resolvable:$true] %s28
      %34 = dma.hbm_to_vmem [thread:$0]  %s1, 1024, %s29, [#allocation6], 64, 64, 4
    $region9: #{tpu_custom_call.1} parent=1 // pred_fallthru
      _
    // Predicated region
    $region10: #{tpu_custom_call.1} parent=1 // pred_check
      _
    $region11: #{tpu_custom_call.1} parent=1 // pred_check_branch
      %36 = sbr.rel (0) target = $region13
    $region12: #{tpu_custom_call.1} parent=1 // pred_region
      _
    $region13: #{tpu_custom_call.1} parent=1 // pred_fallthru
      _
    // Predicated region
    $region14: #{tpu_custom_call.1} parent=1 // pred_check
      _
    $region15: #{tpu_custom_call.1} parent=1 // pred_check_branch
      %38 = sbr.rel (0) target = $region17
    $region16: #{tpu_custom_call.1} parent=1 // pred_region
      %39 = dma.done [#allocation3], 256
    $region17: #{tpu_custom_call.1} parent=1 // pred_fallthru
      _
    // Predicated region
    $region18: #{tpu_custom_call.1} parent=1 // pred_check
      _
    $region19: #{tpu_custom_call.1} parent=1 // pred_check_branch
      %41 = sbr.rel (0) target = $region21
    $region20: #{tpu_custom_call.1} parent=1 // pred_region
      %42 = dma.done [#allocation6], 1024
    $region21: #{tpu_custom_call.1} parent=1 // pred_fallthru
      _
    %v44 = vld [vmem:[#allocation5] sm:$0xf]
    %v45 = vld [vmem:[#allocation5 + $0x4] sm:$0xf]
    %v46 = vld [vmem:[#allocation5 + $0x8] sm:$0xf]
    %v47 = vld [vmem:[#allocation5 + $0xc] sm:$0xf]
    %v48 = vld [vmem:[#allocation5 + $0x10] sm:$0xf]
    %v49 = vld [vmem:[#allocation5 + $0x14] sm:$0xf]
    %v50 = vld [vmem:[#allocation5 + $0x18] sm:$0xf]
    %v51 = vld [vmem:[#allocation5 + $0x1c] sm:$0xf]
    %v52 = vld [vmem:[#allocation5 + $0x20] sm:$0xf]
    %v53 = vld [vmem:[#allocation5 + $0x24] sm:$0xf]
    %v54 = vld [vmem:[#allocation5 + $0x28] sm:$0xf]
    %v55 = vld [vmem:[#allocation5 + $0x2c] sm:$0xf]
    %v56 = vld [vmem:[#allocation5 + $0x30] sm:$0xf]
    %v57 = vld [vmem:[#allocation5 + $0x34] sm:$0xf]
    %v58 = vld [vmem:[#allocation5 + $0x38] sm:$0xf]
    %v59 = vld [vmem:[#allocation5 + $0x3c] sm:$0xf]
    %v60 = vld [vmem:[%s2] sm:$0x1]
    %v61 = vld [vmem:[#allocation2] sm:$0xff]
    %v62 = vld [vmem:[#allocation2 + $0x8] sm:$0xff]
    %v63 = vpack.c.bf16 %v62, %v61
    %v65 = vlaneseq
    %v66 = vshrl.u32 %v65, 7
    %v67 = vsub.s32 0, %v66
    %v68 = vrot.slane %v60, %v67
    %v86 = vunpack.c.l.b16 %v44
    %v87 = vunpack.c.l.b16 %v45
    %v88 = vunpack.c.l.b16 %v46
    %v89 = vunpack.c.l.b16 %v47
    %v90 = vunpack.c.l.b16 %v48
    %v91 = vunpack.c.l.b16 %v49
    %v92 = vunpack.c.l.b16 %v50
    %v93 = vunpack.c.l.b16 %v51
    %v94 = vunpack.c.l.b16 %v52
    %v95 = vunpack.c.l.b16 %v53
    %v96 = vunpack.c.l.b16 %v54
    %v97 = vunpack.c.l.b16 %v55
    %v98 = vunpack.c.l.b16 %v56
    %v99 = vunpack.c.l.b16 %v57
    %v100 = vunpack.c.l.b16 %v58
    %v101 = vunpack.c.l.b16 %v59
    %v102 = vpack.c.b16 %v87, %v86
    %v103 = vpack.c.b16 %v89, %v88
    %v104 = vpack.c.b16 %v91, %v90
    %v105 = vpack.c.b16 %v93, %v92
    %v106 = vpack.c.b16 %v95, %v94
    %v107 = vpack.c.b16 %v97, %v96
    %v108 = vpack.c.b16 %v99, %v98
    %v109 = vpack.c.b16 %v101, %v100
    %118 = vmatprep.subr.bf16.mxu0 0
    %119 = vmatpush1.bf16.msra.mxu0 %v102
    %120 = vmatprep.subr.bf16.mxu0 0
    %121 = vmatpush1.bf16.msra.mxu0 %v103
    %122 = vmatprep.subr.bf16.mxu0 0
    %123 = vmatpush1.bf16.msra.mxu0 %v104
    %124 = vmatprep.subr.bf16.mxu0 0
    %125 = vmatpush1.bf16.msra.mxu0 %v105
    %126 = vmatprep.subr.bf16.mxu0 0
    %127 = vmatpush1.bf16.msra.mxu0 %v106
    %128 = vmatprep.subr.bf16.mxu0 0
    %129 = vmatpush1.bf16.msra.mxu0 %v107
    %130 = vmatprep.subr.bf16.mxu0 0
    %131 = vmatpush1.bf16.msra.mxu0 %v108
    %132 = vmatprep.subr.bf16.mxu0 0
    %133 = vmatpush1.bf16.msra.mxu0 %v109
    %134 = vmatprep.subr.bf16.mxu0 0
    %135 = vmatpush1.bf16.msra.mxu0 0
    %136 = vmatprep.subr.bf16.mxu0 0
    %137 = vmatpush1.bf16.msra.mxu0 0
    %138 = vmatprep.subr.bf16.mxu0 0
    %139 = vmatpush1.bf16.msra.mxu0 0
    %140 = vmatprep.subr.bf16.mxu0 0
    %141 = vmatpush1.bf16.msra.mxu0 0
    %142 = vmatprep.subr.bf16.mxu0 0
    %143 = vmatpush1.bf16.msra.mxu0 0
    %144 = vmatprep.subr.bf16.mxu0 0
    %145 = vmatpush1.bf16.msra.mxu0 0
    %146 = vmatprep.subr.bf16.mxu0 0
    %147 = vmatpush1.bf16.msra.mxu0 0
    %148 = vmatprep.subr.bf16.mxu0 0
    %149 = vmatpush1.bf16.msra.mxu0 0
    %150 = vmatprep.mubr.bf16.mxu0 0
    %151 = vmatmul.mubr.bf16.gmra.mrb[0].mxu0 %v63
    %v152 = vpop.f32.mrb[0].mxu0
    %v153 = vadd.f32 %v68, %v152
    %v154 = vpop.f32.mrb[0].mxu0
    %v155 = vpop.f32.mrb[0].mxu0
    %v156 = vadd.f32 %v68, %v155
    %v157 = vpop.f32.mrb[0].mxu0
    %158 = vdwg.mxu0
    %v159 = vmax.f32 %v153, 0.0
    %v160 = vmax.f32 %v156, 0.0
    %v161 = vpack.c.bf16 %v160, %v159
    %162 = vmatprep.subr.bf16.mxu0 0
    %163 = vmatpush1.bf16.msra.mxu0 %v102
    %164 = vmatprep.subr.bf16.mxu0 0
    %165 = vmatpush1.bf16.msra.mxu0 %v103
    %166 = vmatprep.subr.bf16.mxu0 0
    %167 = vmatpush1.bf16.msra.mxu0 %v104
    %168 = vmatprep.subr.bf16.mxu0 0
    %169 = vmatpush1.bf16.msra.mxu0 %v105
    %170 = vmatprep.subr.bf16.mxu0 0
    %171 = vmatpush1.bf16.msra.mxu0 %v106
    %172 = vmatprep.subr.bf16.mxu0 0
    %173 = vmatpush1.bf16.msra.mxu0 %v107
    %174 = vmatprep.subr.bf16.mxu0 0
    %175 = vmatpush1.bf16.msra.mxu0 %v108
    %176 = vmatprep.subr.bf16.mxu0 0
    %177 = vmatpush1.bf16.msra.mxu0 %v109
    %178 = vmatprep.subr.bf16.mxu0 0
    %179 = vmatpush1.bf16.msra.mxu0 0
    %180 = vmatprep.subr.bf16.mxu0 0
    %181 = vmatpush1.bf16.msra.mxu0 0
    %182 = vmatprep.subr.bf16.mxu0 0
    %183 = vmatpush1.bf16.msra.mxu0 0
    %184 = vmatprep.subr.bf16.mxu0 0
    %185 = vmatpush1.bf16.msra.mxu0 0
    %186 = vmatprep.subr.bf16.mxu0 0
    %187 = vmatpush1.bf16.msra.mxu0 0
    %188 = vmatprep.subr.bf16.mxu0 0
    %189 = vmatpush1.bf16.msra.mxu0 0
    %190 = vmatprep.subr.bf16.mxu0 0
    %191 = vmatpush1.bf16.msra.mxu0 0
    %192 = vmatprep.subr.bf16.mxu0 0
    %193 = vmatpush1.bf16.msra.mxu0 0
    %194 = vmatprep.mubr.bf16.mxu0 0
    %195 = vmatmul.mubr.bf16.gmra.mrb[0].mxu0 %v161
    %v196 = vpop.f32.mrb[0].mxu0
    %v197 = vadd.f32 %v68, %v196
    %v198 = vpop.f32.mrb[0].mxu0
    %v199 = vpop.f32.mrb[0].mxu0
    %v200 = vadd.f32 %v68, %v199
    %v201 = vpop.f32.mrb[0].mxu0
    %202 = vdwg.mxu0
    %v203 = vmax.f32 %v197, 0.0
    %v204 = vmax.f32 %v200, 0.0
    %v205 = vpack.c.bf16 %v204, %v203
    %206 = vmatprep.subr.bf16.mxu0 0
    %207 = vmatpush1.bf16.msra.mxu0 %v102
    %208 = vmatprep.subr.bf16.mxu0 0
    %209 = vmatpush1.bf16.msra.mxu0 %v103
    %210 = vmatprep.subr.bf16.mxu0 0
    %211 = vmatpush1.bf16.msra.mxu0 %v104
    %212 = vmatprep.subr.bf16.mxu0 0
    %213 = vmatpush1.bf16.msra.mxu0 %v105
    %214 = vmatprep.subr.bf16.mxu0 0
    %215 = vmatpush1.bf16.msra.mxu0 %v106
    %216 = vmatprep.subr.bf16.mxu0 0
    %217 = vmatpush1.bf16.msra.mxu0 %v107
    %218 = vmatprep.subr.bf16.mxu0 0
    %219 = vmatpush1.bf16.msra.mxu0 %v108
    %220 = vmatprep.subr.bf16.mxu0 0
    %221 = vmatpush1.bf16.msra.mxu0 %v109
    %222 = vmatprep.subr.bf16.mxu0 0
    %223 = vmatpush1.bf16.msra.mxu0 0
    %224 = vmatprep.subr.bf16.mxu0 0
    %225 = vmatpush1.bf16.msra.mxu0 0
    %226 = vmatprep.subr.bf16.mxu0 0
    %227 = vmatpush1.bf16.msra.mxu0 0
    %228 = vmatprep.subr.bf16.mxu0 0
    %229 = vmatpush1.bf16.msra.mxu0 0
    %230 = vmatprep.subr.bf16.mxu0 0
    %231 = vmatpush1.bf16.msra.mxu0 0
    %232 = vmatprep.subr.bf16.mxu0 0
    %233 = vmatpush1.bf16.msra.mxu0 0
    %234 = vmatprep.subr.bf16.mxu0 0
    %235 = vmatpush1.bf16.msra.mxu0 0
    %236 = vmatprep.subr.bf16.mxu0 0
    %237 = vmatpush1.bf16.msra.mxu0 0
    %238 = vmatprep.mubr.bf16.mxu0 0
    %239 = vmatmul.mubr.bf16.gmra.mrb[0].mxu0 %v205
    %v240 = vpop.f32.mrb[0].mxu0
    %v241 = vadd.f32 %v68, %v240
    %v242 = vpop.f32.mrb[0].mxu0
    %v243 = vpop.f32.mrb[0].mxu0
    %v244 = vadd.f32 %v68, %v243
    %v245 = vpop.f32.mrb[0].mxu0
    %246 = vdwg.mxu0
    %v247 = vmax.f32 %v241, 0.0
    %v248 = vmax.f32 %v244, 0.0
    %v249 = vpack.c.bf16 %v248, %v247
    %250 = vmatprep.subr.bf16.mxu0 0
    %251 = vmatpush1.bf16.msra.mxu0 %v102
    %252 = vmatprep.subr.bf16.mxu0 0
    %253 = vmatpush1.bf16.msra.mxu0 %v103
    %254 = vmatprep.subr.bf16.mxu0 0
    %255 = vmatpush1.bf16.msra.mxu0 %v104
    %256 = vmatprep.subr.bf16.mxu0 0
    %257 = vmatpush1.bf16.msra.mxu0 %v105
    %258 = vmatprep.subr.bf16.mxu0 0
    %259 = vmatpush1.bf16.msra.mxu0 %v106
    %260 = vmatprep.subr.bf16.mxu0 0
    %261 = vmatpush1.bf16.msra.mxu0 %v107
    %262 = vmatprep.subr.bf16.mxu0 0
    %263 = vmatpush1.bf16.msra.mxu0 %v108
    %264 = vmatprep.subr.bf16.mxu0 0
    %265 = vmatpush1.bf16.msra.mxu0 %v109
    %266 = vmatprep.subr.bf16.mxu0 0
    %267 = vmatpush1.bf16.msra.mxu0 0
    %268 = vmatprep.subr.bf16.mxu0 0
    %269 = vmatpush1.bf16.msra.mxu0 0
    %270 = vmatprep.subr.bf16.mxu0 0
    %271 = vmatpush1.bf16.msra.mxu0 0
    %272 = vmatprep.subr.bf16.mxu0 0
    %273 = vmatpush1.bf16.msra.mxu0 0
    %274 = vmatprep.subr.bf16.mxu0 0
    %275 = vmatpush1.bf16.msra.mxu0 0
    %276 = vmatprep.subr.bf16.mxu0 0
    %277 = vmatpush1.bf16.msra.mxu0 0
    %278 = vmatprep.subr.bf16.mxu0 0
    %279 = vmatpush1.bf16.msra.mxu0 0
    %280 = vmatprep.subr.bf16.mxu0 0
    %281 = vmatpush1.bf16.msra.mxu0 0
    %282 = vmatprep.mubr.bf16.mxu0 0
    %283 = vmatmul.mubr.bf16.gmra.mrb[0].mxu0 %v249
    %v284 = vpop.f32.mrb[0].mxu0
    %v285 = vadd.f32 %v68, %v284
    %v286 = vpop.f32.mrb[0].mxu0
    %v287 = vpop.f32.mrb[0].mxu0
    %v288 = vadd.f32 %v68, %v287
    %v289 = vpop.f32.mrb[0].mxu0
    %290 = vdwg.mxu0
    %v291 = vmax.f32 %v285, 0.0
    %v292 = vmax.f32 %v288, 0.0
    %v293 = vpack.c.bf16 %v292, %v291
    %294 = vmatprep.subr.bf16.mxu0 0
    %295 = vmatpush1.bf16.msra.mxu0 %v102
    %296 = vmatprep.subr.bf16.mxu0 0
    %297 = vmatpush1.bf16.msra.mxu0 %v103
    %298 = vmatprep.subr.bf16.mxu0 0
    %299 = vmatpush1.bf16.msra.mxu0 %v104
    %300 = vmatprep.subr.bf16.mxu0 0
    %301 = vmatpush1.bf16.msra.mxu0 %v105
    %302 = vmatprep.subr.bf16.mxu0 0
    %303 = vmatpush1.bf16.msra.mxu0 %v106
    %304 = vmatprep.subr.bf16.mxu0 0
    %305 = vmatpush1.bf16.msra.mxu0 %v107
    %306 = vmatprep.subr.bf16.mxu0 0
    %307 = vmatpush1.bf16.msra.mxu0 %v108
    %308 = vmatprep.subr.bf16.mxu0 0
    %309 = vmatpush1.bf16.msra.mxu0 %v109
    %310 = vmatprep.subr.bf16.mxu0 0
    %311 = vmatpush1.bf16.msra.mxu0 0
    %312 = vmatprep.subr.bf16.mxu0 0
    %313 = vmatpush1.bf16.msra.mxu0 0
    %314 = vmatprep.subr.bf16.mxu0 0
    %315 = vmatpush1.bf16.msra.mxu0 0
    %316 = vmatprep.subr.bf16.mxu0 0
    %317 = vmatpush1.bf16.msra.mxu0 0
    %318 = vmatprep.subr.bf16.mxu0 0
    %319 = vmatpush1.bf16.msra.mxu0 0
    %320 = vmatprep.subr.bf16.mxu0 0
    %321 = vmatpush1.bf16.msra.mxu0 0
    %322 = vmatprep.subr.bf16.mxu0 0
    %323 = vmatpush1.bf16.msra.mxu0 0
    %324 = vmatprep.subr.bf16.mxu0 0
    %325 = vmatpush1.bf16.msra.mxu0 0
    %326 = vmatprep.mubr.bf16.mxu0 0
    %327 = vmatmul.mubr.bf16.gmra.mrb[0].mxu0 %v293
    %v328 = vpop.f32.mrb[0].mxu0
    %v329 = vadd.f32 %v68, %v328
    %v330 = vpop.f32.mrb[0].mxu0
    %v331 = vpop.f32.mrb[0].mxu0
    %v332 = vadd.f32 %v68, %v331
    %v333 = vpop.f32.mrb[0].mxu0
    %334 = vdwg.mxu0
    %v335 = vmax.f32 %v329, 0.0
    %v336 = vmax.f32 %v332, 0.0
    %v337 = vpack.c.bf16 %v336, %v335
    %338 = vmatprep.subr.bf16.mxu0 0
    %339 = vmatpush1.bf16.msra.mxu0 %v102
    %340 = vmatprep.subr.bf16.mxu0 0
    %341 = vmatpush1.bf16.msra.mxu0 %v103
    %342 = vmatprep.subr.bf16.mxu0 0
    %343 = vmatpush1.bf16.msra.mxu0 %v104
    %344 = vmatprep.subr.bf16.mxu0 0
    %345 = vmatpush1.bf16.msra.mxu0 %v105
    %346 = vmatprep.subr.bf16.mxu0 0
    %347 = vmatpush1.bf16.msra.mxu0 %v106
    %348 = vmatprep.subr.bf16.mxu0 0
    %349 = vmatpush1.bf16.msra.mxu0 %v107
    %350 = vmatprep.subr.bf16.mxu0 0
    %351 = vmatpush1.bf16.msra.mxu0 %v108
    %352 = vmatprep.subr.bf16.mxu0 0
    %353 = vmatpush1.bf16.msra.mxu0 %v109
    %354 = vmatprep.subr.bf16.mxu0 0
    %355 = vmatpush1.bf16.msra.mxu0 0
    %356 = vmatprep.subr.bf16.mxu0 0
    %357 = vmatpush1.bf16.msra.mxu0 0
    %358 = vmatprep.subr.bf16.mxu0 0
    %359 = vmatpush1.bf16.msra.mxu0 0
    %360 = vmatprep.subr.bf16.mxu0 0
    %361 = vmatpush1.bf16.msra.mxu0 0
    %362 = vmatprep.subr.bf16.mxu0 0
    %363 = vmatpush1.bf16.msra.mxu0 0
    %364 = vmatprep.subr.bf16.mxu0 0
    %365 = vmatpush1.bf16.msra.mxu0 0
    %366 = vmatprep.subr.bf16.mxu0 0
    %367 = vmatpush1.bf16.msra.mxu0 0
    %368 = vmatprep.subr.bf16.mxu0 0
    %369 = vmatpush1.bf16.msra.mxu0 0
    %370 = vmatprep.mubr.bf16.mxu0 0
    %371 = vmatmul.mubr.bf16.gmra.mrb[0].mxu0 %v337
    %v372 = vpop.f32.mrb[0].mxu0
    %v373 = vadd.f32 %v68, %v372
    %v374 = vpop.f32.mrb[0].mxu0
    %v375 = vpop.f32.mrb[0].mxu0
    %v376 = vadd.f32 %v68, %v375
    %v377 = vpop.f32.mrb[0].mxu0
    %378 = vdwg.mxu0
    %v379 = vmax.f32 %v373, 0.0
    %v380 = vmax.f32 %v376, 0.0
    %381 = vst [vmem:[#allocation7] sm:$0xff] %v379
    %382 = vst [vmem:[#allocation7 + $0x8] sm:$0xff] %v380
    // Predicated region
    $region22: #{tpu_custom_call.1} parent=1 // pred_check
      _
    $region23: #{tpu_custom_call.1} parent=1 // pred_check_branch
      %384 = sbr.rel (0) target = $region25
    $region24: #{tpu_custom_call.1} parent=1 // pred_region
      %s386 = ssub.s32 256, 256
      %387 = vsyncadd [#allocation4], %s386
      %s388 = sshll.u32 [#allocation7], 4
      %s389 = int_to_ptr.vmem [resolvable:$true] %s388
      %394 = dma.vmem_to_hbm [thread:$0]  %s389, 256, %s3, [#allocation4], 128, 128, 8
    $region25: #{tpu_custom_call.1} parent=1 // pred_fallthru
      _
    // Predicated region
    $region26: #{tpu_custom_call.1} parent=1 // pred_check
      _
    $region27: #{tpu_custom_call.1} parent=1 // pred_check_branch
      %396 = sbr.rel (0) target = $region29
    $region28: #{tpu_custom_call.1} parent=1 // pred_region
      %397 = dma.done [#allocation4], 256
    $region29: #{tpu_custom_call.1} parent=1 // pred_fallthru
      _
    %398 = vsyncpa [#allocation3], 1
    %399 = vsyncpa [#allocation6], 1
    %400 = vsyncpa [#allocation4], 1

// kernel: tpu_custom_call.1
$region0: #{tpu_custom_call.1}
  #allocation0 [shape = 'u32[]', space=smem, size = 0x4, offset = 0x4, fixed_abs, tag = 'smem constant byte address 0x4 - core index']
  #allocation1 [shape = 'u32[144,128]{1,0:T(1,128)}', space=vmem, size = 0x12000, scoped, tag = 'internal scratch']
  %s0 = inlined_call_operand.hbm [shape: f32[16,128], index: 0, kind: input, shape index: {}]
  %s1 = inlined_call_operand.hbm [shape: bf16[128,128], index: 1, kind: input, shape index: {}]
  %s2 = inlined_call_operand.vmem [shape: f32[1,128], index: 2, kind: input, shape index: {}]
  %s3 = inlined_call_operand.hbm [shape: f32[16,128], index: 3, kind: output, shape index: {}]
  %s4 = sld [smem:[#allocation0]]
  $region30: #{tpu_custom_call.1} parent=0
    _
  %s6 = ssub.s32 1, %s4
  %s7 = scalar_select 0, %s6, %s4
  $region1: #{tpu_custom_call.1} parent=0
    #allocation2 [shape = 'u8[8192]{0}', space=vmem, size = 0x2000, scoped, tag = 'input window, operand 0, single buffered']
    #allocation3 [shape = 's32[1]{0}', space=sflag, size = 0x4, scoped, tag = 'scoped memory for tpu_custom_call.1']
    #allocation4 [shape = 's32[1]{0}', space=sflag, size = 0x4, scoped, tag = 'scoped memory for tpu_custom_call.1']
    #allocation5 [shape = 'u8[32768]{0}', space=vmem, size = 0x8000, scoped, tag = 'input window, operand 1, single buffered']
    #allocation6 [shape = 's32[1]{0}', space=sflag, size = 0x4, scoped, tag = 'scoped memory for tpu_custom_call.1']
    #allocation7 [shape = 'u8[8192]{0}', space=vmem, size = 0x2000, scoped, tag = 'output window, operand 0, single buffered']
    %8 = vsyncpa [#allocation3], 0
    %9 = vsyncpa [#allocation6], 0
    %10 = vsyncpa [#allocation4], 0
    // Predicated region
    $region2: #{tpu_custom_call.1} parent=1 // pred_check
      _
    $region3: #{tpu_custom_call.1} parent=1 // pred_check_branch
      %12 = sbr.rel (0) target = $region5
    $region4: #{tpu_custom_call.1} parent=1 // pred_region
      %s14 = ssub.s32 256, 256
      %15 = vsyncadd [#allocation3], %s14
      %s16 = sshll.u32 [#allocation2], 4
      %s17 = int_to_ptr.vmem [resolvable:$true] %s16
      %22 = dma.hbm_to_vmem [thread:$0]  %s0, 256, %s17, [#allocation3], 128, 128, 8
    $region5: #{tpu_custom_call.1} parent=1 // pred_fallthru
      _
    // Predicated region
    $region6: #{tpu_custom_call.1} parent=1 // pred_check
      _
    $region7: #{tpu_custom_call.1} parent=1 // pred_check_branch
      %24 = sbr.rel (0) target = $region9
    $region8: #{tpu_custom_call.1} parent=1 // pred_region
      %s26 = ssub.s32 1024, 1024
      %27 = vsyncadd [#allocation6], %s26
      %s28 = sshll.u32 [#allocation5], 4
      %s29 = int_to_ptr.vmem [resolvable:$true] %s28
      %34 = dma.hbm_to_vmem [thread:$0]  %s1, 1024, %s29, [#allocation6], 64, 64, 4
    $region9: #{tpu_custom_call.1} parent=1 // pred_fallthru
      _
    // Predicated region
    $region10: #{tpu_custom_call.1} parent=1 // pred_check
      _
    $region11: #{tpu_custom_call.1} parent=1 // pred_check_branch
      %36 = sbr.rel (0) target = $region13
    $region12: #{tpu_custom_call.1} parent=1 // pred_region
      _
    $region13: #{tpu_custom_call.1} parent=1 // pred_fallthru
      _
    // Predicated region
    $region14: #{tpu_custom_call.1} parent=1 // pred_check
      _
    $region15: #{tpu_custom_call.1} parent=1 // pred_check_branch
      %38 = sbr.rel (0) target = $region17
    $region16: #{tpu_custom_call.1} parent=1 // pred_region
      %39 = dma.done [#allocation3], 256
    $region17: #{tpu_custom_call.1} parent=1 // pred_fallthru
      _
    // Predicated region
    $region18: #{tpu_custom_call.1} parent=1 // pred_check
      _
    $region19: #{tpu_custom_call.1} parent=1 // pred_check_branch
      %41 = sbr.rel (0) target = $region21
    $region20: #{tpu_custom_call.1} parent=1 // pred_region
      %42 = dma.done [#allocation6], 1024
    $region21: #{tpu_custom_call.1} parent=1 // pred_fallthru
      _
    %v44 = vld [vmem:[#allocation5] sm:$0xf]
    %v45 = vld [vmem:[#allocation5 + $0x4] sm:$0xf]
    %v46 = vld [vmem:[#allocation5 + $0x8] sm:$0xf]
    %v47 = vld [vmem:[#allocation5 + $0xc] sm:$0xf]
    %v48 = vld [vmem:[#allocation5 + $0x10] sm:$0xf]
    %v49 = vld [vmem:[#allocation5 + $0x14] sm:$0xf]
    %v50 = vld [vmem:[#allocation5 + $0x18] sm:$0xf]
    %v51 = vld [vmem:[#allocation5 + $0x1c] sm:$0xf]
    %v52 = vld [vmem:[#allocation5 + $0x20] sm:$0xf]
    %v53 = vld [vmem:[#allocation5 + $0x24] sm:$0xf]
    %v54 = vld [vmem:[#allocation5 + $0x28] sm:$0xf]
    %v55 = vld [vmem:[#allocation5 + $0x2c] sm:$0xf]
    %v56 = vld [vmem:[#allocation5 + $0x30] sm:$0xf]
    %v57 = vld [vmem:[#allocation5 + $0x34] sm:$0xf]
    %v58 = vld [vmem:[#allocation5 + $0x38] sm:$0xf]
    %v59 = vld [vmem:[#allocation5 + $0x3c] sm:$0xf]
    %v60 = vld [vmem:[%s2] sm:$0x1]
    %v61 = vld [vmem:[#allocation2] sm:$0xff]
    %v62 = vld [vmem:[#allocation2 + $0x8] sm:$0xff]
    %v63 = vpack.c.bf16 %v62, %v61
    %v65 = vlaneseq
    %v66 = vshrl.u32 %v65, 7
    %v67 = vsub.s32 0, %v66
    %v68 = vrot.slane %v60, %v67
    %v86 = vunpack.c.l.b16 %v44
    %v87 = vunpack.c.l.b16 %v45
    %v88 = vunpack.c.l.b16 %v46
    %v89 = vunpack.c.l.b16 %v47
    %v90 = vunpack.c.l.b16 %v48
    %v91 = vunpack.c.l.b16 %v49
    %v92 = vunpack.c.l.b16 %v50
    %v93 = vunpack.c.l.b16 %v51
    %v94 = vunpack.c.l.b16 %v52
    %v95 = vunpack.c.l.b16 %v53
    %v96 = vunpack.c.l.b16 %v54
    %v97 = vunpack.c.l.b16 %v55
    %v98 = vunpack.c.l.b16 %v56
    %v99 = vunpack.c.l.b16 %v57
    %v100 = vunpack.c.l.b16 %v58
    %v101 = vunpack.c.l.b16 %v59
    %v102 = vpack.c.b16 %v87, %v86
    %v103 = vpack.c.b16 %v89, %v88
    %v104 = vpack.c.b16 %v91, %v90
    %v105 = vpack.c.b16 %v93, %v92
    %v106 = vpack.c.b16 %v95, %v94
    %v107 = vpack.c.b16 %v97, %v96
    %v108 = vpack.c.b16 %v99, %v98
    %v109 = vpack.c.b16 %v101, %v100
    %118 = vmatprep.subr.bf16.mxu0 0
    %119 = vmatpush1.bf16.msra.mxu0 %v102
    %120 = vmatprep.subr.bf16.mxu0 0
    %121 = vmatpush1.bf16.msra.mxu0 %v103
    %122 = vmatprep.subr.bf16.mxu0 0
    %123 = vmatpush1.bf16.msra.mxu0 %v104
    %124 = vmatprep.subr.bf16.mxu0 0
    %125 = vmatpush1.bf16.msra.mxu0 %v105
    %126 = vmatprep.subr.bf16.mxu0 0
    %127 = vmatpush1.bf16.msra.mxu0 %v106
    %128 = vmatprep.subr.bf16.mxu0 0
    %129 = vmatpush1.bf16.msra.mxu0 %v107
    %130 = vmatprep.subr.bf16.mxu0 0
    %131 = vmatpush1.bf16.msra.mxu0 %v108
    %132 = vmatprep.subr.bf16.mxu0 0
    %133 = vmatpush1.bf16.msra.mxu0 %v109
    %134 = vmatprep.subr.bf16.mxu0 0
    %135 = vmatpush1.bf16.msra.mxu0 0
    %136 = vmatprep.subr.bf16.mxu0 0
    %137 = vmatpush1.bf16.msra.mxu0 0
    %138 = vmatprep.subr.bf16.mxu0 0
    %139 = vmatpush1.bf16.msra.mxu0 0
    %140 = vmatprep.subr.bf16.mxu0 0
    %141 = vmatpush1.bf16.msra.mxu0 0
    %142 = vmatprep.subr.bf16.mxu0 0
    %143 = vmatpush1.bf16.msra.mxu0 0
    %144 = vmatprep.subr.bf16.mxu0 0
    %145 = vmatpush1.bf16.msra.mxu0 0
    %146 = vmatprep.subr.bf16.mxu0 0
    %147 = vmatpush1.bf16.msra.mxu0 0
    %148 = vmatprep.subr.bf16.mxu0 0
    %149 = vmatpush1.bf16.msra.mxu0 0
    %150 = vmatprep.mubr.bf16.mxu0 0
    %151 = vmatmul.mubr.bf16.gmra.mrb[0].mxu0 %v63
    %v152 = vpop.f32.mrb[0].mxu0
    %v153 = vadd.f32 %v68, %v152
    %v154 = vpop.f32.mrb[0].mxu0
    %v155 = vpop.f32.mrb[0].mxu0
    %v156 = vadd.f32 %v68, %v155
    %v157 = vpop.f32.mrb[0].mxu0
    %158 = vdwg.mxu0
    %v159 = vmax.f32 %v153, 0.0
    %v160 = vmax.f32 %v156, 0.0
    %v161 = vpack.c.bf16 %v160, %v159
    %162 = vmatprep.subr.bf16.mxu0 0
    %163 = vmatpush1.bf16.msra.mxu0 %v102
    %164 = vmatprep.subr.bf16.mxu0 0
    %165 = vmatpush1.bf16.msra.mxu0 %v103
    %166 = vmatprep.subr.bf16.mxu0 0
    %167 = vmatpush1.bf16.msra.mxu0 %v104
    %168 = vmatprep.subr.bf16.mxu0 0
    %169 = vmatpush1.bf16.msra.mxu0 %v105
    %170 = vmatprep.subr.bf16.mxu0 0
    %171 = vmatpush1.bf16.msra.mxu0 %v106
    %172 = vmatprep.subr.bf16.mxu0 0
    %173 = vmatpush1.bf16.msra.mxu0 %v107
    %174 = vmatprep.subr.bf16.mxu0 0
    %175 = vmatpush1.bf16.msra.mxu0 %v108
    %176 = vmatprep.subr.bf16.mxu0 0
    %177 = vmatpush1.bf16.msra.mxu0 %v109
    %178 = vmatprep.subr.bf16.mxu0 0
    %179 = vmatpush1.bf16.msra.mxu0 0
    %180 = vmatprep.subr.bf16.mxu0 0
    %181 = vmatpush1.bf16.msra.mxu0 0
    %182 = vmatprep.subr.bf16.mxu0 0
    %183 = vmatpush1.bf16.msra.mxu0 0
    %184 = vmatprep.subr.bf16.mxu0 0
    %185 = vmatpush1.bf16.msra.mxu0 0
    %186 = vmatprep.subr.bf16.mxu0 0
    %187 = vmatpush1.bf16.msra.mxu0 0
    %188 = vmatprep.subr.bf16.mxu0 0
    %189 = vmatpush1.bf16.msra.mxu0 0
    %190 = vmatprep.subr.bf16.mxu0 0
    %191 = vmatpush1.bf16.msra.mxu0 0
    %192 = vmatprep.subr.bf16.mxu0 0
    %193 = vmatpush1.bf16.msra.mxu0 0
    %194 = vmatprep.mubr.bf16.mxu0 0
    %195 = vmatmul.mubr.bf16.gmra.mrb[0].mxu0 %v161
    %v196 = vpop.f32.mrb[0].mxu0
    %v197 = vadd.f32 %v68, %v196
    %v198 = vpop.f32.mrb[0].mxu0
    %v199 = vpop.f32.mrb[0].mxu0
    %v200 = vadd.f32 %v68, %v199
    %v201 = vpop.f32.mrb[0].mxu0
    %202 = vdwg.mxu0
    %v203 = vmax.f32 %v197, 0.0
    %v204 = vmax.f32 %v200, 0.0
    %v205 = vpack.c.bf16 %v204, %v203
    %206 = vmatprep.subr.bf16.mxu0 0
    %207 = vmatpush1.bf16.msra.mxu0 %v102
    %208 = vmatprep.subr.bf16.mxu0 0
    %209 = vmatpush1.bf16.msra.mxu0 %v103
    %210 = vmatprep.subr.bf16.mxu0 0
    %211 = vmatpush1.bf16.msra.mxu0 %v104
    %212 = vmatprep.subr.bf16.mxu0 0
    %213 = vmatpush1.bf16.msra.mxu0 %v105
    %214 = vmatprep.subr.bf16.mxu0 0
    %215 = vmatpush1.bf16.msra.mxu0 %v106
    %216 = vmatprep.subr.bf16.mxu0 0
    %217 = vmatpush1.bf16.msra.mxu0 %v107
    %218 = vmatprep.subr.bf16.mxu0 0
    %219 = vmatpush1.bf16.msra.mxu0 %v108
    %220 = vmatprep.subr.bf16.mxu0 0
    %221 = vmatpush1.bf16.msra.mxu0 %v109
    %222 = vmatprep.subr.bf16.mxu0 0
    %223 = vmatpush1.bf16.msra.mxu0 0
    %224 = vmatprep.subr.bf16.mxu0 0
    %225 = vmatpush1.bf16.msra.mxu0 0
    %226 = vmatprep.subr.bf16.mxu0 0
    %227 = vmatpush1.bf16.msra.mxu0 0
    %228 = vmatprep.subr.bf16.mxu0 0
    %229 = vmatpush1.bf16.msra.mxu0 0
    %230 = vmatprep.subr.bf16.mxu0 0
    %231 = vmatpush1.bf16.msra.mxu0 0
    %232 = vmatprep.subr.bf16.mxu0 0
    %233 = vmatpush1.bf16.msra.mxu0 0
    %234 = vmatprep.subr.bf16.mxu0 0
    %235 = vmatpush1.bf16.msra.mxu0 0
    %236 = vmatprep.subr.bf16.mxu0 0
    %237 = vmatpush1.bf16.msra.mxu0 0
    %238 = vmatprep.mubr.bf16.mxu0 0
    %239 = vmatmul.mubr.bf16.gmra.mrb[0].mxu0 %v205
    %v240 = vpop.f32.mrb[0].mxu0
    %v241 = vadd.f32 %v68, %v240
    %v242 = vpop.f32.mrb[0].mxu0
    %v243 = vpop.f32.mrb[0].mxu0
    %v244 = vadd.f32 %v68, %v243
    %v245 = vpop.f32.mrb[0].mxu0
    %246 = vdwg.mxu0
    %v247 = vmax.f32 %v241, 0.0
    %v248 = vmax.f32 %v244, 0.0
    %v249 = vpack.c.bf16 %v248, %v247
    %250 = vmatprep.subr.bf16.mxu0 0
    %251 = vmatpush1.bf16.msra.mxu0 %v102
    %252 = vmatprep.subr.bf16.mxu0 0
    %253 = vmatpush1.bf16.msra.mxu0 %v103
    %254 = vmatprep.subr.bf16.mxu0 0
    %255 = vmatpush1.bf16.msra.mxu0 %v104
    %256 = vmatprep.subr.bf16.mxu0 0
    %257 = vmatpush1.bf16.msra.mxu0 %v105
    %258 = vmatprep.subr.bf16.mxu0 0
    %259 = vmatpush1.bf16.msra.mxu0 %v106
    %260 = vmatprep.subr.bf16.mxu0 0
    %261 = vmatpush1.bf16.msra.mxu0 %v107
    %262 = vmatprep.subr.bf16.mxu0 0
    %263 = vmatpush1.bf16.msra.mxu0 %v108
    %264 = vmatprep.subr.bf16.mxu0 0
    %265 = vmatpush1.bf16.msra.mxu0 %v109
    %266 = vmatprep.subr.bf16.mxu0 0
    %267 = vmatpush1.bf16.msra.mxu0 0
    %268 = vmatprep.subr.bf16.mxu0 0
    %269 = vmatpush1.bf16.msra.mxu0 0
    %270 = vmatprep.subr.bf16.mxu0 0
    %271 = vmatpush1.bf16.msra.mxu0 0
    %272 = vmatprep.subr.bf16.mxu0 0
    %273 = vmatpush1.bf16.msra.mxu0 0
    %274 = vmatprep.subr.bf16.mxu0 0
    %275 = vmatpush1.bf16.msra.mxu0 0
    %276 = vmatprep.subr.bf16.mxu0 0
    %277 = vmatpush1.bf16.msra.mxu0 0
    %278 = vmatprep.subr.bf16.mxu0 0
    %279 = vmatpush1.bf16.msra.mxu0 0
    %280 = vmatprep.subr.bf16.mxu0 0
    %281 = vmatpush1.bf16.msra.mxu0 0
    %282 = vmatprep.mubr.bf16.mxu0 0
    %283 = vmatmul.mubr.bf16.gmra.mrb[0].mxu0 %v249
    %v284 = vpop.f32.mrb[0].mxu0
    %v285 = vadd.f32 %v68, %v284
    %v286 = vpop.f32.mrb[0].mxu0
    %v287 = vpop.f32.mrb[0].mxu0
    %v288 = vadd.f32 %v68, %v287
    %v289 = vpop.f32.mrb[0].mxu0
    %290 = vdwg.mxu0
    %v291 = vmax.f32 %v285, 0.0
    %v292 = vmax.f32 %v288, 0.0
    %v293 = vpack.c.bf16 %v292, %v291
    %294 = vmatprep.subr.bf16.mxu0 0
    %295 = vmatpush1.bf16.msra.mxu0 %v102
    %296 = vmatprep.subr.bf16.mxu0 0
    %297 = vmatpush1.bf16.msra.mxu0 %v103
    %298 = vmatprep.subr.bf16.mxu0 0
    %299 = vmatpush1.bf16.msra.mxu0 %v104
    %300 = vmatprep.subr.bf16.mxu0 0
    %301 = vmatpush1.bf16.msra.mxu0 %v105
    %302 = vmatprep.subr.bf16.mxu0 0
    %303 = vmatpush1.bf16.msra.mxu0 %v106
    %304 = vmatprep.subr.bf16.mxu0 0
    %305 = vmatpush1.bf16.msra.mxu0 %v107
    %306 = vmatprep.subr.bf16.mxu0 0
    %307 = vmatpush1.bf16.msra.mxu0 %v108
    %308 = vmatprep.subr.bf16.mxu0 0
    %309 = vmatpush1.bf16.msra.mxu0 %v109
    %310 = vmatprep.subr.bf16.mxu0 0
    %311 = vmatpush1.bf16.msra.mxu0 0
    %312 = vmatprep.subr.bf16.mxu0 0
    %313 = vmatpush1.bf16.msra.mxu0 0
    %314 = vmatprep.subr.bf16.mxu0 0
    %315 = vmatpush1.bf16.msra.mxu0 0
    %316 = vmatprep.subr.bf16.mxu0 0
    %317 = vmatpush1.bf16.msra.mxu0 0
    %318 = vmatprep.subr.bf16.mxu0 0
    %319 = vmatpush1.bf16.msra.mxu0 0
    %320 = vmatprep.subr.bf16.mxu0 0
    %321 = vmatpush1.bf16.msra.mxu0 0
    %322 = vmatprep.subr.bf16.mxu0 0
    %323 = vmatpush1.bf16.msra.mxu0 0
    %324 = vmatprep.subr.bf16.mxu0 0
    %325 = vmatpush1.bf16.msra.mxu0 0
    %326 = vmatprep.mubr.bf16.mxu0 0
    %327 = vmatmul.mubr.bf16.gmra.mrb[0].mxu0 %v293
    %v328 = vpop.f32.mrb[0].mxu0
    %v329 = vadd.f32 %v68, %v328
    %v330 = vpop.f32.mrb[0].mxu0
    %v331 = vpop.f32.mrb[0].mxu0
    %v332 = vadd.f32 %v68, %v331
    %v333 = vpop.f32.mrb[0].mxu0
    %334 = vdwg.mxu0
    %v335 = vmax.f32 %v329, 0.0
    %v336 = vmax.f32 %v332, 0.0
    %v337 = vpack.c.bf16 %v336, %v335
    %338 = vmatprep.subr.bf16.mxu0 0
    %339 = vmatpush1.bf16.msra.mxu0 %v102
    %340 = vmatprep.subr.bf16.mxu0 0
    %341 = vmatpush1.bf16.msra.mxu0 %v103
    %342 = vmatprep.subr.bf16.mxu0 0
    %343 = vmatpush1.bf16.msra.mxu0 %v104
    %344 = vmatprep.subr.bf16.mxu0 0
    %345 = vmatpush1.bf16.msra.mxu0 %v105
    %346 = vmatprep.subr.bf16.mxu0 0
    %347 = vmatpush1.bf16.msra.mxu0 %v106
    %348 = vmatprep.subr.bf16.mxu0 0
    %349 = vmatpush1.bf16.msra.mxu0 %v107
    %350 = vmatprep.subr.bf16.mxu0 0
    %351 = vmatpush1.bf16.msra.mxu0 %v108
    %352 = vmatprep.subr.bf16.mxu0 0
    %353 = vmatpush1.bf16.msra.mxu0 %v109
    %354 = vmatprep.subr.bf16.mxu0 0
    %355 = vmatpush1.bf16.msra.mxu0 0
    %356 = vmatprep.subr.bf16.mxu0 0
    %357 = vmatpush1.bf16.msra.mxu0 0
    %358 = vmatprep.subr.bf16.mxu0 0
    %359 = vmatpush1.bf16.msra.mxu0 0
    %360 = vmatprep.subr.bf16.mxu0 0
    %361 = vmatpush1.bf16.msra.mxu0 0
    %362 = vmatprep.subr.bf16.mxu0 0
    %363 = vmatpush1.bf16.msra.mxu0 0
    %364 = vmatprep.subr.bf16.mxu0 0
    %365 = vmatpush1.bf16.msra.mxu0 0
    %366 = vmatprep.subr.bf16.mxu0 0
    %367 = vmatpush1.bf16.msra.mxu0 0
    %368 = vmatprep.subr.bf16.mxu0 0
    %369 = vmatpush1.bf16.msra.mxu0 0
    %370 = vmatprep.mubr.bf16.mxu0 0
    %371 = vmatmul.mubr.bf16.gmra.mrb[0].mxu0 %v337
    %v372 = vpop.f32.mrb[0].mxu0
    %v373 = vadd.f32 %v68, %v372
    %v374 = vpop.f32.mrb[0].mxu0
    %v375 = vpop.f32.mrb[0].mxu0
    %v376 = vadd.f32 %v68, %v375
    %v377 = vpop.f32.mrb[0].mxu0
    %378 = vdwg.mxu0
    %v379 = vmax.f32 %v373, 0.0
    %v380 = vmax.f32 %v376, 0.0
    %381 = vst [vmem:[#allocation7] sm:$0xff] %v379
    %382 = vst [vmem:[#allocation7 + $0x8] sm:$0xff] %v380
    // Predicated region
    $region22: #{tpu_custom_call.1} parent=1 // pred_check
      _
    $region23: #{tpu_custom_call.1} parent=1 // pred_check_branch
      %384 = sbr.rel (0) target = $region25
    $region24: #{tpu_custom_call.1} parent=1 // pred_region
      %s386 = ssub.s32 256, 256
      %387 = vsyncadd [#allocation4], %s386
      %s388 = sshll.u32 [#allocation7], 4
      %s389 = int_to_ptr.vmem [resolvable:$true] %s388
      %394 = dma.vmem_to_hbm [thread:$0]  %s389, 256, %s3, [#allocation4], 128, 128, 8
    $region25: #{tpu_custom_call.1} parent=1 // pred_fallthru
      _
    // Predicated region
    $region26: #{tpu_custom_call.1} parent=1 // pred_check
      _
    $region27: #{tpu_custom_call.1} parent=1 // pred_check_branch
      %396 = sbr.rel (0) target = $region29
    $region28: #{tpu_custom_call.1} parent=1 // pred_region
      %397 = dma.done [#allocation4], 256
    $region29: #{tpu_custom_call.1} parent=1 // pred_fallthru
      _
    %398 = vsyncpa [#allocation3], 1
    %399 = vsyncpa [#allocation6], 1
    %400 = vsyncpa [#allocation4], 1

</llo_original>
